<compile_context>
chip_gen: v7x
topology: tpu7x:2x2x1
jax: 0.10.0
libtpu: 0.0.40
codegen_flags: <defaults>
</compile_context>

<pallas_src>
import functools

import jax
import jax.numpy as jnp
import numpy as np
from jax import lax
from jax.experimental import pallas as pl
from jax.experimental.pallas import tpu as pltpu


# --------------------------------------------------------------------------- #
# The fused MS_TCN kernel
# --------------------------------------------------------------------------- #
def _ms_tcn_kernel(x_ref, w1_ref, b1_ref, lin_ref, wt_ref, b2_ref, ps_ref,
                   pb_ref, o_ref, *, bc, k, dils, t, v, c_out, has_res_conv):
    """One batch sample per grid step.  Shapes (per step):
       x_ref : (C_in, L)            L = T*V
       w1_ref: (C1, C_in)  bf16     stacked, BN-scale-folded 1x1 weights
       b1_ref: (C1, 1)              stacked BN shifts
       lin_ref:(C1, 1)              1.0 = no ReLU row, 0.0 = ReLU row
       wt_ref: (4*bc, 4*bc*k) bf16  block-diagonal temporal-conv weight (BN folded)
       b2_ref: (4*bc, 1)            temporal-conv BN shifts
       ps_ref/pb_ref: (bc, 1)       pool-branch second BN scale / shift
       o_ref : (C_out, L)
    """
    l = t * v
    nd = len(dils)

    x = x_ref[...]                                              # (C_in, L) f32

    # ---- fused 1x1 convs of all branches (+ residual conv) : one MXU matmul
    y = jnp.dot(w1_ref[...], x.astype(jnp.bfloat16),
                preferred_element_type=jnp.float32)             # (C1, L) f32
    y = y + b1_ref[...]
    # per-row ReLU (lin=0) or identity (lin=1):  max(y, y*lin)
    y = jnp.maximum(y, y * lin_ref[...])

    lane = lax.broadcasted_iota(jnp.int32, (bc, l), 1)

    def shift_time(slab, o):
        # S[:, ti*V + vi] = slab[:, (ti+o)*V + vi], zero outside [0, T)
        if o == 0:
            return slab
        s = (-o * v) % l
        r = pltpu.roll(slab, shift=s, axis=1)
        if o > 0:
            return jnp.where(lane < l - o * v, r, 0.0)
        return jnp.where(lane >= (-o) * v, r, 0.0)

    # ---- dilated temporal-conv branches: in-VMEM im2col + one block matmul
    half = (k - 1) // 2
    cols = []
    for bi, d in enumerate(dils):
        sl = y[bi * bc:(bi + 1) * bc]                           # (bc, L)
        for j in range(k):
            cols.append(shift_time(sl, (j - half) * d))
    cols = jnp.concatenate(cols, axis=0).astype(jnp.bfloat16)   # (4*bc*k, L)
    y_dil = jnp.dot(wt_ref[...], cols,
                    preferred_element_type=jnp.float32) + b2_ref[...]   # (4*bc, L)

    # ---- avg-pool branch: AvgPool((3,1), pad 1, count_include_pad) + BN
    yp = y[nd * bc:(nd + 1) * bc]                               # (bc, L)
    pooled = (shift_time(yp, -1) + yp + shift_time(yp, 1)) * (1.0 / 3.0)
    y_pool = pooled * ps_ref[...] + pb_ref[...]

    # ---- plain 1x1 branch (already final: 1x1 conv + BN, no activation)
    y_pw = y[(nd + 1) * bc:(nd + 2) * bc]

    # ---- residual
    if has_res_conv:
        res = y[(nd + 2) * bc:(nd + 2) * bc + c_out]            # (C_out, L)
    else:
        res = x                                                 # identity (C_in == C_out)

    # ---- "concat" by writing channel slices + residual add + ReLU
    o_ref[0:nd * bc, :] = jnp.maximum(y_dil + res[0:nd * bc], 0.0)
    o_ref[nd * bc:(nd + 1) * bc, :] = jnp.maximum(
        y_pool + res[nd * bc:(nd + 1) * bc], 0.0)
    o_ref[(nd + 1) * bc:(nd + 2) * bc, :] = jnp.maximum(
        y_pw + res[(nd + 1) * bc:(nd + 2) * bc], 0.0)


def ms_tcn_pallas(x, kparams, dilations, k=3):
    """x: (N, C_in, T, V) f32 -> (N, C_out, T, V) f32."""
    assert k % 2 == 1, "odd temporal kernel size expected"
    n, c_in, t, v = x.shape
    l = t * v
    nd = len(dilations)
    bc = kparams["b2"].shape[0] // nd
    c_out = (nd + 2) * bc
    c1 = kparams["w1"].shape[0]
    has_res_conv = c1 > (nd + 2) * bc
    if not has_res_conv:
        assert c_in == c_out, "identity residual requires c_in == c_out"

    x_r = x.reshape(n, c_in, l)                                 # free reshape (NC(TV))

    kernel = functools.partial(
        _ms_tcn_kernel, bc=bc, k=k, dils=tuple(dilations), t=t, v=v,
        c_out=c_out, has_res_conv=has_res_conv)

    const = lambda i: (0, 0)                                    # weights stay resident
    out = pl.pallas_call(
        kernel,
        out_shape=jax.ShapeDtypeStruct((n, c_out, l), jnp.float32),
        grid=(n,),
        in_specs=[
            pl.BlockSpec((None, c_in, l), lambda i: (i, 0, 0)),     # x (per sample)
            pl.BlockSpec(kparams["w1"].shape, const),
            pl.BlockSpec(kparams["b1"].shape, const),
            pl.BlockSpec(kparams["lin"].shape, const),
            pl.BlockSpec(kparams["wt"].shape, const),
            pl.BlockSpec(kparams["b2"].shape, const),
            pl.BlockSpec(kparams["ps"].shape, const),
            pl.BlockSpec(kparams["pb"].shape, const),
        ],
        out_specs=pl.BlockSpec((None, c_out, l), lambda i: (i, 0, 0)),
        compiler_params=pltpu.CompilerParams(
            dimension_semantics=("parallel",)),
    )(x_r, kparams["w1"], kparams["b1"], kparams["lin"], kparams["wt"],
      kparams["b2"], kparams["ps"], kparams["pb"])
    return out.reshape(n, c_out, t, v)


# --------------------------------------------------------------------------- #
# Parameter init (deterministic, synthetic; inference-mode BN folded)
# --------------------------------------------------------------------------- #
def _fold_bn(gamma, beta, mean, var, eps=1e-5):
    scale = gamma / jnp.sqrt(var + eps)
    shift = beta - mean * scale
    return (scale.reshape(-1, 1).astype(jnp.float32),
            shift.reshape(-1, 1).astype(jnp.float32))


def init_params(key, c_in, c_out, dilations, k=3):
    nb = len(dilations) + 2
    assert c_out % nb == 0, "# out channels should be multiples of # branches"
    bc = c_out // nb
    kit = iter(jax.random.split(key, 128))

    def w(shape):
        return 0.2 * jax.random.normal(next(kit), shape, jnp.float32)

    def bn(c):
        gamma = 1.0 + 0.1 * jax.random.normal(next(kit), (c,), jnp.float32)
        beta = 0.1 * jax.random.normal(next(kit), (c,), jnp.float32)
        mean = 0.1 * jax.random.normal(next(kit), (c,), jnp.float32)
        var = 0.5 + jnp.abs(jax.random.normal(next(kit), (c,), jnp.float32))
        return _fold_bn(gamma, beta, mean, var)

    branches = []
    for _ in dilations:
        s1, b1 = bn(bc)
        s2, b2 = bn(bc)
        branches.append(dict(w1=w((bc, c_in)), s1=s1, b1=b1,
                             wt=w((bc, bc, k)), s2=s2, b2=b2))
    s1, b1 = bn(bc)
    s2, b2 = bn(bc)
    pool_branch = dict(w1=w((bc, c_in)), s1=s1, b1=b1, s2=s2, b2=b2)
    s1, b1 = bn(bc)
    pw_branch = dict(w1=w((bc, c_in)), s1=s1, b1=b1)

    if c_in == c_out:          # (and stride == 1) -> identity residual
        residual = None
    else:                      # TemporalConv(c_in, c_out, kernel_size=1) residual
        sr, br = bn(c_out)
        residual = dict(w=w((c_out, c_in)), s=sr, b=br)

    return dict(branches=branches, pool_branch=pool_branch,
                pw_branch=pw_branch, residual=residual)


def pack_kernel_params(params, dilations, k, c_in, c_out):
    """Fold BN scales into weights, stack all 1x1 convs, build the
    block-diagonal temporal-conv weight.  Matmul weights cast to bf16."""
    nd = len(dilations)
    bc = c_out // (nd + 2)

    w_rows, b_rows, lin_rows = [], [], []
    for p in params["branches"]:                     # 1x1 + BN + ReLU
        w_rows.append(p["s1"] * p["w1"]); b_rows.append(p["b1"])
        lin_rows.append(jnp.zeros((bc, 1), jnp.float32))
    pa = params["pool_branch"]                       # 1x1 + BN + ReLU
    w_rows.append(pa["s1"] * pa["w1"]); b_rows.append(pa["b1"])
    lin_rows.append(jnp.zeros((bc, 1), jnp.float32))
    pb = params["pw_branch"]                         # 1x1 + BN (no ReLU)
    w_rows.append(pb["s1"] * pb["w1"]); b_rows.append(pb["b1"])
    lin_rows.append(jnp.ones((bc, 1), jnp.float32))
    if params["residual"] is not None:               # residual 1x1 + BN (no ReLU)
        pr = params["residual"]
        w_rows.append(pr["s"] * pr["w"]); b_rows.append(pr["b"])
        lin_rows.append(jnp.ones((c_out, 1), jnp.float32))

    w1 = jnp.concatenate(w_rows, axis=0).astype(jnp.bfloat16)
    b1 = jnp.concatenate(b_rows, axis=0).astype(jnp.float32)
    lin = jnp.concatenate(lin_rows, axis=0).astype(jnp.float32)

    # Block-diagonal temporal-conv weight: (4*bc, 4*bc*k), BN scale folded in.
    wt_np = np.zeros((nd * bc, nd * k * bc), np.float32)
    b2_rows = []
    for bi, p in enumerate(params["branches"]):
        wtf = np.asarray(p["s2"])[:, :, None] * np.asarray(p["wt"])  # (bc, bc, k)
        for j in range(k):
            wt_np[bi * bc:(bi + 1) * bc,
                  (bi * k + j) * bc:(bi * k + j + 1) * bc] = wtf[:, :, j]
        b2_rows.append(p["b2"])
    wt = jnp.asarray(wt_np).astype(jnp.bfloat16)
    b2 = jnp.concatenate(b2_rows, axis=0).astype(jnp.float32)

    return dict(w1=w1, b1=b1, lin=lin, wt=wt, b2=b2,
                ps=pa["s2"].astype(jnp.float32), pb=pa["b2"].astype(jnp.float32))


# --------------------------------------------------------------------------- #
# Pure-JAX reference (for the correctness check)
# --------------------------------------------------------------------------- #
def reference_forward(x, params, dilations, k=3):
    dn = ("NCHW", "OIHW", "NCHW")
    hp = lax.Precision.HIGHEST

    def conv1x1(xx, w):
        return lax.conv_general_dilated(xx, w[:, :, None, None], (1, 1), "VALID",
                                        dimension_numbers=dn, precision=hp)

    def bn(y, s, b):
        return y * s.reshape(1, -1, 1, 1) + b.reshape(1, -1, 1, 1)

    outs = []
    for bi, d in enumerate(dilations):
        p = params["branches"][bi]
        y = jnp.maximum(bn(conv1x1(x, p["w1"]), p["s1"], p["b1"]), 0.0)
        pad = (k + (k - 1) * (d - 1) - 1) // 2
        y = lax.conv_general_dilated(y, p["wt"][:, :, :, None], (1, 1),
                                     [(pad, pad), (0, 0)], rhs_dilation=(d, 1),
                                     dimension_numbers=dn, precision=hp)
        outs.append(bn(y, p["s2"], p["b2"]))

    pa = params["pool_branch"]
    y = jnp.maximum(bn(conv1x1(x, pa["w1"]), pa["s1"], pa["b1"]), 0.0)
    y = lax.reduce_window(y, 0.0, lax.add, (1, 1, 3, 1), (1, 1, 1, 1),
                          ((0, 0), (0, 0), (1, 1), (0, 0))) / 3.0
    outs.append(bn(y, pa["s2"], pa["b2"]))

    pb = params["pw_branch"]
    outs.append(bn(conv1x1(x, pb["w1"]), pb["s1"], pb["b1"]))

    out = jnp.concatenate(outs, axis=1)
    if params["residual"] is None:
        res = x
    else:
        pr = params["residual"]
        res = bn(conv1x1(x, pr["w"]), pr["s"], pr["b"])
    return jnp.maximum(out + res, 0.0)


# --------------------------------------------------------------------------- #
if __name__ == "__main__":
    N, C_IN, T, V = 2, 16, 16, 8         # per-sample slab = T*V = 128 lanes
    C_OUT = 48                           # 6 branches * 8 channels each
    DILATIONS = [1, 2, 3, 4]

    key = jax.random.PRNGKey(0)
    kx, kp = jax.random.split(key)
    x = jax.random.normal(kx, (N, C_IN, T, V), jnp.float32)
    params = init_params(kp, C_IN, C_OUT, DILATIONS)
    kparams = pack_kernel_params(params, DILATIONS, 3, C_IN, C_OUT)

    fwd = jax.jit(lambda xx: ms_tcn_pallas(xx, kparams, DILATIONS))
    out = jax.block_until_ready(fwd(x))

    ref = reference_forward(x, params, DILATIONS)
    # bf16 matmul operands (f32 accumulate) -> slightly looser tolerance.
    np.testing.assert_allclose(np.asarray(out), np.asarray(ref),
                               rtol=2e-2, atol=2e-2)
    assert out.shape == (N, C_OUT, T, V)
    print("KERNEL_OK")
</pallas_src>

<mosaic_0001>
module attributes {stable_mosaic.version = 11 : i64} {
  func.func @_ms_tcn_kernel(%arg0: i32, %arg1: memref<1x16x128xf32, #tpu.memory_space<vmem>>, %arg2: memref<96x16xbf16, #tpu.memory_space<vmem>>, %arg3: memref<96x1xf32, #tpu.memory_space<vmem>>, %arg4: memref<96x1xf32, #tpu.memory_space<vmem>>, %arg5: memref<32x96xbf16, #tpu.memory_space<vmem>>, %arg6: memref<32x1xf32, #tpu.memory_space<vmem>>, %arg7: memref<8x1xf32, #tpu.memory_space<vmem>>, %arg8: memref<8x1xf32, #tpu.memory_space<vmem>>, %arg9: memref<1x48x128xf32, #tpu.memory_space<vmem>>) attributes {dimension_semantics = [#tpu.dimension_semantics<parallel>], iteration_bounds = array<i64: 2>, scalar_prefetch = 0 : i64, scratch_operands = 0 : i64, tpu.core_type = #tpu.core_type<tc>, window_params = [{transform_indices = @transform_0, window_bounds = array<i64: 1, 16, 128>}, {pipeline_mode = #tpu.pipeline_mode<synchronous>, transform_indices = @transform_1, window_bounds = array<i64: 96, 16>}, {pipeline_mode = #tpu.pipeline_mode<synchronous>, transform_indices = @transform_2, window_bounds = array<i64: 96, 1>}, {pipeline_mode = #tpu.pipeline_mode<synchronous>, transform_indices = @transform_3, window_bounds = array<i64: 96, 1>}, {pipeline_mode = #tpu.pipeline_mode<synchronous>, transform_indices = @transform_4, window_bounds = array<i64: 32, 96>}, {pipeline_mode = #tpu.pipeline_mode<synchronous>, transform_indices = @transform_5, window_bounds = array<i64: 32, 1>}, {pipeline_mode = #tpu.pipeline_mode<synchronous>, transform_indices = @transform_6, window_bounds = array<i64: 8, 1>}, {pipeline_mode = #tpu.pipeline_mode<synchronous>, transform_indices = @transform_7, window_bounds = array<i64: 8, 1>}, {transform_indices = @transform_8, window_bounds = array<i64: 1, 48, 128>}]} {
    %c0 = arith.constant 0 : index
    %c0_0 = arith.constant 0 : index
    %c0_1 = arith.constant 0 : index
    %0 = vector.load %arg1[%c0, %c0_0, %c0_1] : memref<1x16x128xf32, #tpu.memory_space<vmem>>, vector<1x16x128xf32>
    %1 = vector.shape_cast %0 : vector<1x16x128xf32> to vector<16x128xf32>
    %c0_2 = arith.constant 0 : index
    %c0_3 = arith.constant 0 : index
    %2 = vector.load %arg2[%c0_2, %c0_3] : memref<96x16xbf16, #tpu.memory_space<vmem>>, vector<96x16xbf16>
    %3 = arith.truncf %1 : vector<16x128xf32> to vector<16x128xbf16>
    %cst = arith.constant dense<0.000000e+00> : vector<96x128xf32>
    %4 = tpu.matmul %2, %3, %cst {dimension_numbers = #tpu.dot_dimension_numbers<[1], [0], [0], [1], [0, 0, 1, 1], [], []>} : vector<96x16xbf16>, vector<16x128xbf16>, vector<96x128xf32> -> vector<96x128xf32>
    %c0_4 = arith.constant 0 : index
    %c0_5 = arith.constant 0 : index
    %5 = vector.load %arg3[%c0_4, %c0_5] : memref<96x1xf32, #tpu.memory_space<vmem>>, vector<96x1xf32>
    %6 = vector.broadcast %5 : vector<96x1xf32> to vector<96x128xf32>
    %7 = arith.addf %4, %6 : vector<96x128xf32>
    %c0_6 = arith.constant 0 : index
    %c0_7 = arith.constant 0 : index
    %8 = vector.load %arg4[%c0_6, %c0_7] : memref<96x1xf32, #tpu.memory_space<vmem>>, vector<96x1xf32>
    %9 = vector.broadcast %8 : vector<96x1xf32> to vector<96x128xf32>
    %10 = arith.mulf %7, %9 : vector<96x128xf32>
    %11 = arith.maximumf %7, %10 : vector<96x128xf32>
    %12 = tpu.iota {dimensions = array<i32: 1>} : vector<8x128xi32>
    %13 = vector.extract_strided_slice %11 {offsets = [0, 0], sizes = [8, 128], strides = [1, 1]} : vector<96x128xf32> to vector<8x128xf32>
    %c8_i32 = arith.constant 8 : i32
    %14 = tpu.dynamic_rotate %13 by %c8_i32 dim 1 : vector<8x128xf32>, i32 -> vector<8x128xf32>
    %c8_i32_8 = arith.constant 8 : i32
    %15 = vector.broadcast %c8_i32_8 : i32 to vector<8x128xi32>
    %16 = arith.cmpi sge, %12, %15 : vector<8x128xi32>
    %cst_9 = arith.constant 0.000000e+00 : f32
    %17 = vector.broadcast %cst_9 : f32 to vector<8x128xf32>
    %18 = arith.select %16, %14, %17 : vector<8x128xi1>, vector<8x128xf32>
    %c120_i32 = arith.constant 120 : i32
    %19 = tpu.dynamic_rotate %13 by %c120_i32 dim 1 : vector<8x128xf32>, i32 -> vector<8x128xf32>
    %c120_i32_10 = arith.constant 120 : i32
    %20 = vector.broadcast %c120_i32_10 : i32 to vector<8x128xi32>
    %21 = arith.cmpi slt, %12, %20 : vector<8x128xi32>
    %cst_11 = arith.constant 0.000000e+00 : f32
    %22 = vector.broadcast %cst_11 : f32 to vector<8x128xf32>
    %23 = arith.select %21, %19, %22 : vector<8x128xi1>, vector<8x128xf32>
    %24 = vector.extract_strided_slice %11 {offsets = [8, 0], sizes = [8, 128], strides = [1, 1]} : vector<96x128xf32> to vector<8x128xf32>
    %c16_i32 = arith.constant 16 : i32
    %25 = tpu.dynamic_rotate %24 by %c16_i32 dim 1 : vector<8x128xf32>, i32 -> vector<8x128xf32>
    %c16_i32_12 = arith.constant 16 : i32
    %26 = vector.broadcast %c16_i32_12 : i32 to vector<8x128xi32>
    %27 = arith.cmpi sge, %12, %26 : vector<8x128xi32>
    %cst_13 = arith.constant 0.000000e+00 : f32
    %28 = vector.broadcast %cst_13 : f32 to vector<8x128xf32>
    %29 = arith.select %27, %25, %28 : vector<8x128xi1>, vector<8x128xf32>
    %c112_i32 = arith.constant 112 : i32
    %30 = tpu.dynamic_rotate %24 by %c112_i32 dim 1 : vector<8x128xf32>, i32 -> vector<8x128xf32>
    %c112_i32_14 = arith.constant 112 : i32
    %31 = vector.broadcast %c112_i32_14 : i32 to vector<8x128xi32>
    %32 = arith.cmpi slt, %12, %31 : vector<8x128xi32>
    %cst_15 = arith.constant 0.000000e+00 : f32
    %33 = vector.broadcast %cst_15 : f32 to vector<8x128xf32>
    %34 = arith.select %32, %30, %33 : vector<8x128xi1>, vector<8x128xf32>
    %35 = vector.extract_strided_slice %11 {offsets = [16, 0], sizes = [8, 128], strides = [1, 1]} : vector<96x128xf32> to vector<8x128xf32>
    %c24_i32 = arith.constant 24 : i32
    %36 = tpu.dynamic_rotate %35 by %c24_i32 dim 1 : vector<8x128xf32>, i32 -> vector<8x128xf32>
    %c24_i32_16 = arith.constant 24 : i32
    %37 = vector.broadcast %c24_i32_16 : i32 to vector<8x128xi32>
    %38 = arith.cmpi sge, %12, %37 : vector<8x128xi32>
    %cst_17 = arith.constant 0.000000e+00 : f32
    %39 = vector.broadcast %cst_17 : f32 to vector<8x128xf32>
    %40 = arith.select %38, %36, %39 : vector<8x128xi1>, vector<8x128xf32>
    %c104_i32 = arith.constant 104 : i32
    %41 = tpu.dynamic_rotate %35 by %c104_i32 dim 1 : vector<8x128xf32>, i32 -> vector<8x128xf32>
    %c104_i32_18 = arith.constant 104 : i32
    %42 = vector.broadcast %c104_i32_18 : i32 to vector<8x128xi32>
    %43 = arith.cmpi slt, %12, %42 : vector<8x128xi32>
    %cst_19 = arith.constant 0.000000e+00 : f32
    %44 = vector.broadcast %cst_19 : f32 to vector<8x128xf32>
    %45 = arith.select %43, %41, %44 : vector<8x128xi1>, vector<8x128xf32>
    %46 = vector.extract_strided_slice %11 {offsets = [24, 0], sizes = [8, 128], strides = [1, 1]} : vector<96x128xf32> to vector<8x128xf32>
    %c32_i32 = arith.constant 32 : i32
    %47 = tpu.dynamic_rotate %46 by %c32_i32 dim 1 : vector<8x128xf32>, i32 -> vector<8x128xf32>
    %c32_i32_20 = arith.constant 32 : i32
    %48 = vector.broadcast %c32_i32_20 : i32 to vector<8x128xi32>
    %49 = arith.cmpi sge, %12, %48 : vector<8x128xi32>
    %cst_21 = arith.constant 0.000000e+00 : f32
    %50 = vector.broadcast %cst_21 : f32 to vector<8x128xf32>
    %51 = arith.select %49, %47, %50 : vector<8x128xi1>, vector<8x128xf32>
    %c96_i32 = arith.constant 96 : i32
    %52 = tpu.dynamic_rotate %46 by %c96_i32 dim 1 : vector<8x128xf32>, i32 -> vector<8x128xf32>
    %c96_i32_22 = arith.constant 96 : i32
    %53 = vector.broadcast %c96_i32_22 : i32 to vector<8x128xi32>
    %54 = arith.cmpi slt, %12, %53 : vector<8x128xi32>
    %cst_23 = arith.constant 0.000000e+00 : f32
    %55 = vector.broadcast %cst_23 : f32 to vector<8x128xf32>
    %56 = arith.select %54, %52, %55 : vector<8x128xi1>, vector<8x128xf32>
    %57 = tpu.concatenate %18, %13, %23, %29, %24, %34, %40, %35, %45, %51, %46, %56 in 0 : vector<8x128xf32>, vector<8x128xf32>, vector<8x128xf32>, vector<8x128xf32>, vector<8x128xf32>, vector<8x128xf32>, vector<8x128xf32>, vector<8x128xf32>, vector<8x128xf32>, vector<8x128xf32>, vector<8x128xf32>, vector<8x128xf32> -> vector<96x128xf32>
    %58 = arith.truncf %57 : vector<96x128xf32> to vector<96x128xbf16>
    %c0_24 = arith.constant 0 : index
    %c0_25 = arith.constant 0 : index
    %59 = vector.load %arg5[%c0_24, %c0_25] : memref<32x96xbf16, #tpu.memory_space<vmem>>, vector<32x96xbf16>
    %cst_26 = arith.constant dense<0.000000e+00> : vector<32x128xf32>
    %60 = tpu.matmul %59, %58, %cst_26 {dimension_numbers = #tpu.dot_dimension_numbers<[1], [0], [0], [1], [0, 0, 1, 1], [], []>} : vector<32x96xbf16>, vector<96x128xbf16>, vector<32x128xf32> -> vector<32x128xf32>
    %c0_27 = arith.constant 0 : index
    %c0_28 = arith.constant 0 : index
    %61 = vector.load %arg6[%c0_27, %c0_28] : memref<32x1xf32, #tpu.memory_space<vmem>>, vector<32x1xf32>
    %62 = vector.broadcast %61 : vector<32x1xf32> to vector<32x128xf32>
    %63 = arith.addf %60, %62 : vector<32x128xf32>
    %64 = vector.extract_strided_slice %11 {offsets = [32, 0], sizes = [8, 128], strides = [1, 1]} : vector<96x128xf32> to vector<8x128xf32>
    %c8_i32_29 = arith.constant 8 : i32
    %65 = tpu.dynamic_rotate %64 by %c8_i32_29 dim 1 : vector<8x128xf32>, i32 -> vector<8x128xf32>
    %c8_i32_30 = arith.constant 8 : i32
    %66 = vector.broadcast %c8_i32_30 : i32 to vector<8x128xi32>
    %67 = arith.cmpi sge, %12, %66 : vector<8x128xi32>
    %cst_31 = arith.constant 0.000000e+00 : f32
    %68 = vector.broadcast %cst_31 : f32 to vector<8x128xf32>
    %69 = arith.select %67, %65, %68 : vector<8x128xi1>, vector<8x128xf32>
    %70 = arith.addf %69, %64 : vector<8x128xf32>
    %c120_i32_32 = arith.constant 120 : i32
    %71 = tpu.dynamic_rotate %64 by %c120_i32_32 dim 1 : vector<8x128xf32>, i32 -> vector<8x128xf32>
    %c120_i32_33 = arith.constant 120 : i32
    %72 = vector.broadcast %c120_i32_33 : i32 to vector<8x128xi32>
    %73 = arith.cmpi slt, %12, %72 : vector<8x128xi32>
    %cst_34 = arith.constant 0.000000e+00 : f32
    %74 = vector.broadcast %cst_34 : f32 to vector<8x128xf32>
    %75 = arith.select %73, %71, %74 : vector<8x128xi1>, vector<8x128xf32>
    %76 = arith.addf %70, %75 : vector<8x128xf32>
    %cst_35 = arith.constant 0.333333343 : f32
    %77 = vector.broadcast %cst_35 : f32 to vector<8x128xf32>
    %78 = arith.mulf %76, %77 : vector<8x128xf32>
    %c0_36 = arith.constant 0 : index
    %c0_37 = arith.constant 0 : index
    %79 = vector.load %arg7[%c0_36, %c0_37] : memref<8x1xf32, #tpu.memory_space<vmem>>, vector<8x1xf32>
    %80 = vector.broadcast %79 : vector<8x1xf32> to vector<8x128xf32>
    %81 = arith.mulf %78, %80 : vector<8x128xf32>
    %c0_38 = arith.constant 0 : index
    %c0_39 = arith.constant 0 : index
    %82 = vector.load %arg8[%c0_38, %c0_39] : memref<8x1xf32, #tpu.memory_space<vmem>>, vector<8x1xf32>
    %83 = vector.broadcast %82 : vector<8x1xf32> to vector<8x128xf32>
    %84 = arith.addf %81, %83 : vector<8x128xf32>
    %85 = vector.extract_strided_slice %11 {offsets = [40, 0], sizes = [8, 128], strides = [1, 1]} : vector<96x128xf32> to vector<8x128xf32>
    %86 = vector.extract_strided_slice %11 {offsets = [48, 0], sizes = [48, 128], strides = [1, 1]} : vector<96x128xf32> to vector<48x128xf32>
    %87 = vector.extract_strided_slice %86 {offsets = [0, 0], sizes = [32, 128], strides = [1, 1]} : vector<48x128xf32> to vector<32x128xf32>
    %88 = arith.addf %63, %87 : vector<32x128xf32>
    %cst_40 = arith.constant 0.000000e+00 : f32
    %89 = vector.broadcast %cst_40 : f32 to vector<32x128xf32>
    %90 = arith.maximumf %88, %89 : vector<32x128xf32>
    %c0_41 = arith.constant 0 : index
    %c0_42 = arith.constant 0 : index
    %c0_43 = arith.constant 0 : index
    %91 = vector.load %arg9[%c0_41, %c0_42, %c0_43] : memref<1x48x128xf32, #tpu.memory_space<vmem>>, vector<1x32x128xf32>
    %92 = vector.shape_cast %91 : vector<1x32x128xf32> to vector<32x128xf32>
    %93 = vector.shape_cast %90 : vector<32x128xf32> to vector<1x32x128xf32>
    tpu.vector_store %arg9[%c0_41, %c0_42, %c0_43], %93 {strides = array<i32>} : memref<1x48x128xf32, #tpu.memory_space<vmem>>, vector<1x32x128xf32>,
    %94 = vector.extract_strided_slice %86 {offsets = [32, 0], sizes = [8, 128], strides = [1, 1]} : vector<48x128xf32> to vector<8x128xf32>
    %95 = arith.addf %84, %94 : vector<8x128xf32>
    %cst_44 = arith.constant 0.000000e+00 : f32
    %96 = vector.broadcast %cst_44 : f32 to vector<8x128xf32>
    %97 = arith.maximumf %95, %96 : vector<8x128xf32>
    %c0_45 = arith.constant 0 : index
    %c32 = arith.constant 32 : index
    %c0_46 = arith.constant 0 : index
    %98 = vector.load %arg9[%c0_45, %c32, %c0_46] : memref<1x48x128xf32, #tpu.memory_space<vmem>>, vector<1x8x128xf32>
    %99 = vector.shape_cast %98 : vector<1x8x128xf32> to vector<8x128xf32>
    %100 = vector.shape_cast %97 : vector<8x128xf32> to vector<1x8x128xf32>
    tpu.vector_store %arg9[%c0_45, %c32, %c0_46], %100 {strides = array<i32>} : memref<1x48x128xf32, #tpu.memory_space<vmem>>, vector<1x8x128xf32>,
    %101 = vector.extract_strided_slice %86 {offsets = [40, 0], sizes = [8, 128], strides = [1, 1]} : vector<48x128xf32> to vector<8x128xf32>
    %102 = arith.addf %85, %101 : vector<8x128xf32>
    %cst_47 = arith.constant 0.000000e+00 : f32
    %103 = vector.broadcast %cst_47 : f32 to vector<8x128xf32>
    %104 = arith.maximumf %102, %103 : vector<8x128xf32>
    %c0_48 = arith.constant 0 : index
    %c40 = arith.constant 40 : index
    %c0_49 = arith.constant 0 : index
    %105 = vector.load %arg9[%c0_48, %c40, %c0_49] : memref<1x48x128xf32, #tpu.memory_space<vmem>>, vector<1x8x128xf32>
    %106 = vector.shape_cast %105 : vector<1x8x128xf32> to vector<8x128xf32>
    %107 = vector.shape_cast %104 : vector<8x128xf32> to vector<1x8x128xf32>
    tpu.vector_store %arg9[%c0_48, %c40, %c0_49], %107 {strides = array<i32>} : memref<1x48x128xf32, #tpu.memory_space<vmem>>, vector<1x8x128xf32>,
    return
  }
  func.func @transform_0(%arg0: i32) -> (i32, i32, i32) {
    %c0_i32 = arith.constant 0 : i32
    %c0_i32_0 = arith.constant 0 : i32
    %c0_i32_1 = arith.constant 0 : i32
    return %arg0, %c0_i32, %c0_i32_0 : i32, i32, i32
  }
  func.func @transform_1(%arg0: i32) -> (i32, i32) {
    %c0_i32 = arith.constant 0 : i32
    %c0_i32_0 = arith.constant 0 : i32
    %c0_i32_1 = arith.constant 0 : i32
    return %c0_i32, %c0_i32_0 : i32, i32
  }
  func.func @transform_2(%arg0: i32) -> (i32, i32) {
    %c0_i32 = arith.constant 0 : i32
    %c0_i32_0 = arith.constant 0 : i32
    %c0_i32_1 = arith.constant 0 : i32
    return %c0_i32, %c0_i32_0 : i32, i32
  }
  func.func @transform_3(%arg0: i32) -> (i32, i32) {
    %c0_i32 = arith.constant 0 : i32
    %c0_i32_0 = arith.constant 0 : i32
    %c0_i32_1 = arith.constant 0 : i32
    return %c0_i32, %c0_i32_0 : i32, i32
  }
  func.func @transform_4(%arg0: i32) -> (i32, i32) {
    %c0_i32 = arith.constant 0 : i32
    %c0_i32_0 = arith.constant 0 : i32
    %c0_i32_1 = arith.constant 0 : i32
    return %c0_i32, %c0_i32_0 : i32, i32
  }
  func.func @transform_5(%arg0: i32) -> (i32, i32) {
    %c0_i32 = arith.constant 0 : i32
    %c0_i32_0 = arith.constant 0 : i32
    %c0_i32_1 = arith.constant 0 : i32
    return %c0_i32, %c0_i32_0 : i32, i32
  }
  func.func @transform_6(%arg0: i32) -> (i32, i32) {
    %c0_i32 = arith.constant 0 : i32
    %c0_i32_0 = arith.constant 0 : i32
    %c0_i32_1 = arith.constant 0 : i32
    return %c0_i32, %c0_i32_0 : i32, i32
  }
  func.func @transform_7(%arg0: i32) -> (i32, i32) {
    %c0_i32 = arith.constant 0 : i32
    %c0_i32_0 = arith.constant 0 : i32
    %c0_i32_1 = arith.constant 0 : i32
    return %c0_i32, %c0_i32_0 : i32, i32
  }
  func.func @transform_8(%arg0: i32) -> (i32, i32, i32) {
    %c0_i32 = arith.constant 0 : i32
    %c0_i32_0 = arith.constant 0 : i32
    %c0_i32_1 = arith.constant 0 : i32
    return %arg0, %c0_i32, %c0_i32_0 : i32, i32, i32
  }
}

</mosaic_0001>

<llo_original>
// kernel: _lambda_.1
$region0: #{_lambda_.1}
  #allocation0 [shape = 'u32[]', space=smem, size = 0x4, offset = 0x4, fixed_abs, tag = 'smem constant byte address 0x4 - core index']
  #allocation1 [shape = 'u32[144,128]{1,0:T(1,128)}', space=vmem, size = 0x12000, scoped, tag = 'internal scratch']
  %s0 = inlined_call_operand.vmem [shape: f32[2,16,128], index: 0, kind: input, shape index: {}]
  %s1 = inlined_call_operand.vmem [shape: bf16[96,16], index: 1, kind: input, shape index: {}]
  %s2 = inlined_call_operand.vmem [shape: f32[96,1], index: 2, kind: input, shape index: {}]
  %s3 = inlined_call_operand.vmem [shape: f32[96,1], index: 3, kind: input, shape index: {}]
  %s4 = inlined_call_operand.vmem [shape: bf16[32,96], index: 4, kind: input, shape index: {}]
  %s5 = inlined_call_operand.vmem [shape: f32[32,1], index: 5, kind: input, shape index: {}]
  %s6 = inlined_call_operand.vmem [shape: f32[8,1], index: 6, kind: input, shape index: {}]
  %s7 = inlined_call_operand.vmem [shape: f32[8,1], index: 7, kind: input, shape index: {}]
  %s8 = inlined_call_operand.vmem [shape: f32[2,48,128], index: 8, kind: output, shape index: {}]
  %s9 = sld [smem:[#allocation0]]
  $region65: #{_lambda_.1} parent=0
    _
  %s11 = ssub.s32 1, %s9
  %s12 = scalar_select 0, %s11, %s9
  loop: start=0, step=1, limit=4
  $region2: #{_lambda_.1} parent=0 // loop_pre_header
    _
  $region3: #{_lambda_.1} parent=0 // loop_header
    %s14 = sphi 0, %s18
    %p15 = scmp.ge.s32.totalorder %s14, 4
    %s24 = sphi 0, %s26
    %s27 = sphi 0, %s24
    %s28 = sphi 0, %s27
    %s44 = sphi 0, %s28
    %s48 = sphi 0, %s48
    %s50 = sphi 0, %s48
    %s51 = sphi 0, %s50
    %s65 = sphi 0, %s51
    %s69 = sphi 0, %s69
    %s71 = sphi 0, %s69
    %s72 = sphi 0, %s71
    %s86 = sphi 0, %s72
    %s90 = sphi 0, %s90
    %s92 = sphi 0, %s90
    %s93 = sphi 0, %s92
    %s107 = sphi 0, %s93
    %s111 = sphi 0, %s111
    %s113 = sphi 0, %s111
    %s114 = sphi 0, %s113
    %s128 = sphi 0, %s114
    %s132 = sphi 0, %s132
    %s134 = sphi 0, %s132
    %s135 = sphi 0, %s134
    %s149 = sphi 0, %s135
    %s153 = sphi 0, %s153
    %s155 = sphi 0, %s153
    %s156 = sphi 0, %s155
    %s170 = sphi 0, %s156
    %s174 = sphi 0, %s174
    %s176 = sphi 0, %s174
    %s177 = sphi 0, %s176
    %s191 = sphi 0, %s177
    %s197 = sphi 0, %s199
    %s200 = sphi 0, %s197
    %s201 = sphi 0, %s200
    %s217 = sphi 0, %s201
  $region4: #{_lambda_.1} parent=0 // loop_header_branch
    %17 = sbr.rel (%p15) target = $region8
  $region5: #{_lambda_.1} parent=0 // loop_body
    %s19 = ssub.s32 %s14, 1
    %s20 = ssub.s32 %s14, 2
    %s21 = sadd.s32 %s14, 1
    %s22 = ssub.s32 %s14, %s21
    %p23 = scmp.eq.s32.totalorder %s22, 0
    %s25 = sadd.s32 %s24, 1
    %s26 = scalar_select %p23, %s24, %s25
    %p29 = pneg %p23
    %p30 = scmp.eq.s32.totalorder %s14, 1
    %p31 = por %p29, %p30
    %p32 = scmp.ne.s32.totalorder %s24, %s27
    %p33 = scmp.eq.s32.totalorder %s14, 0
    %p34 = por %p32, %p33
    %p35 = scmp.ne.s32.totalorder %s24, %s27
    %p36 = scmp.eq.s32.totalorder %s19, 1
    %p37 = por %p35, %p36
    %p38 = scmp.ne.s32.totalorder %s27, %s28
    %p39 = scmp.eq.s32.totalorder %s19, 0
    %p40 = por %p38, %p39
    %p41 = scmp.ne.s32.totalorder %s27, %s28
    %p42 = scmp.eq.s32.totalorder %s20, 1
    %p43 = por %p41, %p42
    %p45 = scmp.ne.s32.totalorder %s28, %s44
    %p46 = scmp.eq.s32.totalorder %s20, 0
    %p47 = por %p45, %p46
    %s49 = sadd.s32 %s48, 1
    %p52 = scmp.eq.s32.totalorder %s14, 1
    %p53 = scmp.ne.s32.totalorder %s48, %s50
    %p54 = scmp.eq.s32.totalorder %s14, 0
    %p55 = por %p53, %p54
    %p56 = scmp.ne.s32.totalorder %s48, %s50
    %p57 = scmp.eq.s32.totalorder %s19, 1
    %p58 = por %p56, %p57
    %p59 = scmp.ne.s32.totalorder %s50, %s51
    %p60 = scmp.eq.s32.totalorder %s19, 0
    %p61 = por %p59, %p60
    %p62 = scmp.ne.s32.totalorder %s50, %s51
    %p63 = scmp.eq.s32.totalorder %s20, 1
    %p64 = por %p62, %p63
    %p66 = scmp.ne.s32.totalorder %s51, %s65
    %p67 = scmp.eq.s32.totalorder %s20, 0
    %p68 = por %p66, %p67
    %s70 = sadd.s32 %s69, 1
    %p73 = scmp.eq.s32.totalorder %s14, 1
    %p74 = scmp.ne.s32.totalorder %s69, %s71
    %p75 = scmp.eq.s32.totalorder %s14, 0
    %p76 = por %p74, %p75
    %p77 = scmp.ne.s32.totalorder %s69, %s71
    %p78 = scmp.eq.s32.totalorder %s19, 1
    %p79 = por %p77, %p78
    %p80 = scmp.ne.s32.totalorder %s71, %s72
    %p81 = scmp.eq.s32.totalorder %s19, 0
    %p82 = por %p80, %p81
    %p83 = scmp.ne.s32.totalorder %s71, %s72
    %p84 = scmp.eq.s32.totalorder %s20, 1
    %p85 = por %p83, %p84
    %p87 = scmp.ne.s32.totalorder %s72, %s86
    %p88 = scmp.eq.s32.totalorder %s20, 0
    %p89 = por %p87, %p88
    %s91 = sadd.s32 %s90, 1
    %p94 = scmp.eq.s32.totalorder %s14, 1
    %p95 = scmp.ne.s32.totalorder %s90, %s92
    %p96 = scmp.eq.s32.totalorder %s14, 0
    %p97 = por %p95, %p96
    %p98 = scmp.ne.s32.totalorder %s90, %s92
    %p99 = scmp.eq.s32.totalorder %s19, 1
    %p100 = por %p98, %p99
    %p101 = scmp.ne.s32.totalorder %s92, %s93
    %p102 = scmp.eq.s32.totalorder %s19, 0
    %p103 = por %p101, %p102
    %p104 = scmp.ne.s32.totalorder %s92, %s93
    %p105 = scmp.eq.s32.totalorder %s20, 1
    %p106 = por %p104, %p105
    %p108 = scmp.ne.s32.totalorder %s93, %s107
    %p109 = scmp.eq.s32.totalorder %s20, 0
    %p110 = por %p108, %p109
    %s112 = sadd.s32 %s111, 1
    %p115 = scmp.eq.s32.totalorder %s14, 1
    %p116 = scmp.ne.s32.totalorder %s111, %s113
    %p117 = scmp.eq.s32.totalorder %s14, 0
    %p118 = por %p116, %p117
    %p119 = scmp.ne.s32.totalorder %s111, %s113
    %p120 = scmp.eq.s32.totalorder %s19, 1
    %p121 = por %p119, %p120
    %p122 = scmp.ne.s32.totalorder %s113, %s114
    %p123 = scmp.eq.s32.totalorder %s19, 0
    %p124 = por %p122, %p123
    %p125 = scmp.ne.s32.totalorder %s113, %s114
    %p126 = scmp.eq.s32.totalorder %s20, 1
    %p127 = por %p125, %p126
    %p129 = scmp.ne.s32.totalorder %s114, %s128
    %p130 = scmp.eq.s32.totalorder %s20, 0
    %p131 = por %p129, %p130
    %s133 = sadd.s32 %s132, 1
    %p136 = scmp.eq.s32.totalorder %s14, 1
    %p137 = scmp.ne.s32.totalorder %s132, %s134
    %p138 = scmp.eq.s32.totalorder %s14, 0
    %p139 = por %p137, %p138
    %p140 = scmp.ne.s32.totalorder %s132, %s134
    %p141 = scmp.eq.s32.totalorder %s19, 1
    %p142 = por %p140, %p141
    %p143 = scmp.ne.s32.totalorder %s134, %s135
    %p144 = scmp.eq.s32.totalorder %s19, 0
    %p145 = por %p143, %p144
    %p146 = scmp.ne.s32.totalorder %s134, %s135
    %p147 = scmp.eq.s32.totalorder %s20, 1
    %p148 = por %p146, %p147
    %p150 = scmp.ne.s32.totalorder %s135, %s149
    %p151 = scmp.eq.s32.totalorder %s20, 0
    %p152 = por %p150, %p151
    %s154 = sadd.s32 %s153, 1
    %p157 = scmp.eq.s32.totalorder %s14, 1
    %p158 = scmp.ne.s32.totalorder %s153, %s155
    %p159 = scmp.eq.s32.totalorder %s14, 0
    %p160 = por %p158, %p159
    %p161 = scmp.ne.s32.totalorder %s153, %s155
    %p162 = scmp.eq.s32.totalorder %s19, 1
    %p163 = por %p161, %p162
    %p164 = scmp.ne.s32.totalorder %s155, %s156
    %p165 = scmp.eq.s32.totalorder %s19, 0
    %p166 = por %p164, %p165
    %p167 = scmp.ne.s32.totalorder %s155, %s156
    %p168 = scmp.eq.s32.totalorder %s20, 1
    %p169 = por %p167, %p168
    %p171 = scmp.ne.s32.totalorder %s156, %s170
    %p172 = scmp.eq.s32.totalorder %s20, 0
    %p173 = por %p171, %p172
    %s175 = sadd.s32 %s174, 1
    %p178 = scmp.eq.s32.totalorder %s14, 1
    %p179 = scmp.ne.s32.totalorder %s174, %s176
    %p180 = scmp.eq.s32.totalorder %s14, 0
    %p181 = por %p179, %p180
    %p182 = scmp.ne.s32.totalorder %s174, %s176
    %p183 = scmp.eq.s32.totalorder %s19, 1
    %p184 = por %p182, %p183
    %p185 = scmp.ne.s32.totalorder %s176, %s177
    %p186 = scmp.eq.s32.totalorder %s19, 0
    %p187 = por %p185, %p186
    %p188 = scmp.ne.s32.totalorder %s176, %s177
    %p189 = scmp.eq.s32.totalorder %s20, 1
    %p190 = por %p188, %p189
    %p192 = scmp.ne.s32.totalorder %s177, %s191
    %p193 = scmp.eq.s32.totalorder %s20, 0
    %p194 = por %p192, %p193
    %s195 = ssub.s32 %s14, %s21
    %p196 = scmp.eq.s32.totalorder %s195, 0
    %s198 = sadd.s32 %s197, 1
    %s199 = scalar_select %p196, %s197, %s198
    %p202 = pneg %p196
    %p203 = scmp.eq.s32.totalorder %s14, 1
    %p204 = por %p202, %p203
    %p205 = scmp.ne.s32.totalorder %s197, %s200
    %p206 = scmp.eq.s32.totalorder %s14, 0
    %p207 = por %p205, %p206
    %p208 = scmp.ne.s32.totalorder %s197, %s200
    %p209 = scmp.eq.s32.totalorder %s19, 1
    %p210 = por %p208, %p209
    %p211 = scmp.ne.s32.totalorder %s200, %s201
    %p212 = scmp.eq.s32.totalorder %s19, 0
    %p213 = por %p211, %p212
    %p214 = scmp.ne.s32.totalorder %s200, %s201
    %p215 = scmp.eq.s32.totalorder %s20, 1
    %p216 = por %p214, %p215
    %p218 = scmp.ne.s32.totalorder %s201, %s217
    %p219 = scmp.eq.s32.totalorder %s20, 0
    %p220 = por %p218, %p219
    %p221 = scmp.le.s32.totalorder 1, %s14
    %p222 = scmp.lt.s32.totalorder %s14, 3
    %p223 = pnand %p221, %p222
    %p224 = pneg %p223
    // Predicated region
    $region9: #{_lambda_.1} parent=5 // pred_check
      _
    $region10: #{_lambda_.1} parent=5 // pred_check_branch
      %226 = sbr.rel (%p223) target = $region12
    $region11: #{_lambda_.1} parent=5 // pred_region
      %s227 = ssub.s32 %s14, 1
      // Predicated region
      $region13: #{_lambda_.1} parent=11 // pred_check
        %p228 = pneg %p61
      $region14: #{_lambda_.1} parent=11 // pred_check_branch
        %230 = sbr.rel (%p228) target = $region16
      $region15: #{_lambda_.1} parent=11 // pred_region
        _
      $region16: #{_lambda_.1} parent=11 // pred_fallthru
        _
      // Predicated region
      $region17: #{_lambda_.1} parent=11 // pred_check
        %p231 = pneg %p82
      $region18: #{_lambda_.1} parent=11 // pred_check_branch
        %233 = sbr.rel (%p231) target = $region20
      $region19: #{_lambda_.1} parent=11 // pred_region
        _
      $region20: #{_lambda_.1} parent=11 // pred_fallthru
        _
      // Predicated region
      $region21: #{_lambda_.1} parent=11 // pred_check
        %p234 = pneg %p103
      $region22: #{_lambda_.1} parent=11 // pred_check_branch
        %236 = sbr.rel (%p234) target = $region24
      $region23: #{_lambda_.1} parent=11 // pred_region
        _
      $region24: #{_lambda_.1} parent=11 // pred_fallthru
        _
      // Predicated region
      $region25: #{_lambda_.1} parent=11 // pred_check
        %p237 = pneg %p124
      $region26: #{_lambda_.1} parent=11 // pred_check_branch
        %239 = sbr.rel (%p237) target = $region28
      $region27: #{_lambda_.1} parent=11 // pred_region
        _
      $region28: #{_lambda_.1} parent=11 // pred_fallthru
        _
      // Predicated region
      $region29: #{_lambda_.1} parent=11 // pred_check
        %p240 = pneg %p145
      $region30: #{_lambda_.1} parent=11 // pred_check_branch
        %242 = sbr.rel (%p240) target = $region32
      $region31: #{_lambda_.1} parent=11 // pred_region
        _
      $region32: #{_lambda_.1} parent=11 // pred_fallthru
        _
      // Predicated region
      $region33: #{_lambda_.1} parent=11 // pred_check
        %p243 = pneg %p166
      $region34: #{_lambda_.1} parent=11 // pred_check_branch
        %245 = sbr.rel (%p243) target = $region36
      $region35: #{_lambda_.1} parent=11 // pred_region
        _
      $region36: #{_lambda_.1} parent=11 // pred_fallthru
        _
      // Predicated region
      $region37: #{_lambda_.1} parent=11 // pred_check
        %p246 = pneg %p187
      $region38: #{_lambda_.1} parent=11 // pred_check_branch
        %248 = sbr.rel (%p246) target = $region40
      $region39: #{_lambda_.1} parent=11 // pred_region
        _
      $region40: #{_lambda_.1} parent=11 // pred_fallthru
        _
    $region12: #{_lambda_.1} parent=5 // pred_fallthru
      _
    %p249 = scmp.lt.s32.totalorder %s14, 2
    // Predicated region
    $region41: #{_lambda_.1} parent=5 // pred_check
      %p250 = pneg %p249
    $region42: #{_lambda_.1} parent=5 // pred_check_branch
      %252 = sbr.rel (%p250) target = $region44
    $region43: #{_lambda_.1} parent=5 // pred_region
      // Predicated region
      $region45: #{_lambda_.1} parent=43 // pred_check
        %p253 = pneg %p34
      $region46: #{_lambda_.1} parent=43 // pred_check_branch
        %255 = sbr.rel (%p253) target = $region48
      $region47: #{_lambda_.1} parent=43 // pred_region
        %p256 = scmp.lt.s32.totalorder %s14, 1
        %s257 = scalar_select %p256, %s14, 1
        %s258 = smul.addr %s257, 2
        %s259 = smul.addr %s258, 8
        %s260 = scalar_lea.vmem %s0, %s259
      $region48: #{_lambda_.1} parent=43 // pred_fallthru
        _
    $region44: #{_lambda_.1} parent=5 // pred_fallthru
      _
    %p261 = scmp.le.s32.totalorder 1, %s14
    %p262 = scmp.lt.s32.totalorder %s14, 3
    %p263 = pnand %p261, %p262
    %p264 = pneg %p263
    // Predicated region
    $region49: #{_lambda_.1} parent=5 // pred_check
      _
    $region50: #{_lambda_.1} parent=5 // pred_check_branch
      %266 = sbr.rel (%p263) target = $region52
    $region51: #{_lambda_.1} parent=5 // pred_region
      %s267 = ssub.s32 %s14, 1
      %p268 = scmp.lt.s32.totalorder %s19, 1
      %s269 = scalar_select %p268, %s19, 1
      %s270 = smul.addr %s269, 2
      %s271 = smul.addr %s270, 8
      %s272 = scalar_lea.vmem %s0, %s271
      %p273 = pneg %p40
      %p274 = pneg %p37
      %p275 = pneg %p61
      %p276 = pneg %p58
      %p277 = pneg %p82
      %p278 = pneg %p79
      %p279 = pneg %p103
      %p280 = pneg %p100
      %p281 = pneg %p124
      %p282 = pneg %p121
      %p283 = pneg %p145
      %p284 = pneg %p142
      %p285 = pneg %p166
      %p286 = pneg %p163
      %p287 = pneg %p187
      %p288 = pneg %p184
      %p289 = pneg %p213
      %p290 = pneg %p210
      %p291 = scmp.lt.s32.totalorder %s19, 1
      %s292 = scalar_select %p291, %s19, 1
      %s293 = smul.addr %s292, 6
      %s294 = smul.addr %s293, 8
      %s295 = scalar_lea.vmem %s8, %s294
      %p296 = scmp.lt.s32.totalorder %s19, 1
      %s297 = scalar_select %p296, %s19, 1
      %s298 = smul.addr %s297, 2
      %s299 = smul.addr %s298, 8
      %s300 = scalar_lea.vmem %s0, %s299
      %p301 = scmp.lt.s32.totalorder %s19, 1
      %s302 = scalar_select %p301, %s19, 1
      %s303 = smul.addr %s302, 6
      %s304 = smul.addr %s303, 8
      %s305 = scalar_lea.vmem %s8, %s304
      %v307 = vld [vmem:[%s300] sm:$0xff]
      %v308 = vld [vmem:[%s300 + $0x8] sm:$0xff]
      %v309 = vld [vmem:[%s1] sm:$0xf]
      %v310 = vld [vmem:[%s1 + $0x4] sm:$0xf]
      %v311 = vld [vmem:[%s1 + $0x8] sm:$0xf]
      %v312 = vld [vmem:[%s1 + $0xc] sm:$0xf]
      %v313 = vld [vmem:[%s1 + $0x10] sm:$0xf]
      %v314 = vld [vmem:[%s1 + $0x14] sm:$0xf]
      %v315 = vld [vmem:[%s1 + $0x18] sm:$0xf]
      %v316 = vld [vmem:[%s1 + $0x1c] sm:$0xf]
      %v317 = vld [vmem:[%s1 + $0x20] sm:$0xf]
      %v318 = vld [vmem:[%s1 + $0x24] sm:$0xf]
      %v319 = vld [vmem:[%s1 + $0x28] sm:$0xf]
      %v320 = vld [vmem:[%s1 + $0x2c] sm:$0xf]
      %v321 = vpack.c.bf16 %v308, %v307
      %v322 = vld [vmem:[%s2] sm:$0xff]
      %v323 = vld [vmem:[%s2 + $0x8] sm:$0xff]
      %v324 = vld [vmem:[%s2 + $0x10] sm:$0xff]
      %v325 = vld [vmem:[%s2 + $0x18] sm:$0xff]
      %v326 = vld [vmem:[%s2 + $0x20] sm:$0xff]
      %v327 = vld [vmem:[%s2 + $0x28] sm:$0xff]
      %v328 = vld [vmem:[%s2 + $0x30] sm:$0xff]
      %v329 = vld [vmem:[%s2 + $0x38] sm:$0xff]
      %v330 = vld [vmem:[%s2 + $0x40] sm:$0xff]
      %v331 = vld [vmem:[%s2 + $0x48] sm:$0xff]
      %v332 = vld [vmem:[%s2 + $0x50] sm:$0xff]
      %v333 = vld [vmem:[%s2 + $0x58] sm:$0xff]
      %335 = vset.pattern.permute.xlu0 0
      %336 = vperm.xlu0 %335, %v322
      %v337 = vpop.permute.xlu0 %336
      %340 = vset.pattern.permute.xlu0 0
      %341 = vperm.xlu0 %340, %v323
      %v342 = vpop.permute.xlu0 %341
      %345 = vset.pattern.permute.xlu0 0
      %346 = vperm.xlu0 %345, %v324
      %v347 = vpop.permute.xlu0 %346
      %350 = vset.pattern.permute.xlu0 0
      %351 = vperm.xlu0 %350, %v325
      %v352 = vpop.permute.xlu0 %351
      %355 = vset.pattern.permute.xlu0 0
      %356 = vperm.xlu0 %355, %v326
      %v357 = vpop.permute.xlu0 %356
      %360 = vset.pattern.permute.xlu0 0
      %361 = vperm.xlu0 %360, %v327
      %v362 = vpop.permute.xlu0 %361
      %365 = vset.pattern.permute.xlu0 0
      %366 = vperm.xlu0 %365, %v328
      %v367 = vpop.permute.xlu0 %366
      %370 = vset.pattern.permute.xlu0 0
      %371 = vperm.xlu0 %370, %v329
      %v372 = vpop.permute.xlu0 %371
      %375 = vset.pattern.permute.xlu0 0
      %376 = vperm.xlu0 %375, %v330
      %v377 = vpop.permute.xlu0 %376
      %380 = vset.pattern.permute.xlu0 0
      %381 = vperm.xlu0 %380, %v331
      %v382 = vpop.permute.xlu0 %381
      %385 = vset.pattern.permute.xlu0 0
      %386 = vperm.xlu0 %385, %v332
      %v387 = vpop.permute.xlu0 %386
      %390 = vset.pattern.permute.xlu0 0
      %391 = vperm.xlu0 %390, %v333
      %v392 = vpop.permute.xlu0 %391
      %v406 = vunpack.c.l.b16 %v309
      %v407 = vunpack.c.l.b16 %v310
      %v408 = vunpack.c.l.b16 %v311
      %v409 = vunpack.c.l.b16 %v312
      %v410 = vunpack.c.l.b16 %v313
      %v411 = vunpack.c.l.b16 %v314
      %v412 = vunpack.c.l.b16 %v315
      %v413 = vunpack.c.l.b16 %v316
      %v414 = vunpack.c.l.b16 %v317
      %v415 = vunpack.c.l.b16 %v318
      %v416 = vunpack.c.l.b16 %v319
      %v417 = vunpack.c.l.b16 %v320
      %v418 = vpack.c.b16 %v407, %v406
      %v419 = vpack.c.b16 %v409, %v408
      %v420 = vpack.c.b16 %v411, %v410
      %v421 = vpack.c.b16 %v413, %v412
      %v422 = vpack.c.b16 %v415, %v414
      %v423 = vpack.c.b16 %v417, %v416
      %vm424 = vcmask 130048
      %v426 = vsel %vm424, %v418, 0
      %v429 = vsel %vm424, %v419, 0
      %v432 = vsel %vm424, %v420, 0
      %v435 = vsel %vm424, %v421, 0
      %v438 = vsel %vm424, %v422, 0
      %v441 = vsel %vm424, %v423, 0
      %443 = vmatprep.subr.bf16.mxu0 0
      %444 = vmatpush1.bf16.msra.mxu0 %v321
      %445 = vmatprep.subr.bf16.mxu0 0
      %446 = vmatpush1.bf16.msra.mxu0 0
      %447 = vmatprep.subr.bf16.mxu0 0
      %448 = vmatpush1.bf16.msra.mxu0 0
      %449 = vmatprep.subr.bf16.mxu0 0
      %450 = vmatpush1.bf16.msra.mxu0 0
      %451 = vmatprep.subr.bf16.mxu0 0
      %452 = vmatpush1.bf16.msra.mxu0 0
      %453 = vmatprep.subr.bf16.mxu0 0
      %454 = vmatpush1.bf16.msra.mxu0 0
      %455 = vmatprep.subr.bf16.mxu0 0
      %456 = vmatpush1.bf16.msra.mxu0 0
      %457 = vmatprep.subr.bf16.mxu0 0
      %458 = vmatpush1.bf16.msra.mxu0 0
      %459 = vmatprep.subr.bf16.mxu0 0
      %460 = vmatpush1.bf16.msra.mxu0 0
      %461 = vmatprep.subr.bf16.mxu0 0
      %462 = vmatpush1.bf16.msra.mxu0 0
      %463 = vmatprep.subr.bf16.mxu0 0
      %464 = vmatpush1.bf16.msra.mxu0 0
      %465 = vmatprep.subr.bf16.mxu0 0
      %466 = vmatpush1.bf16.msra.mxu0 0
      %467 = vmatprep.subr.bf16.mxu0 0
      %468 = vmatpush1.bf16.msra.mxu0 0
      %469 = vmatprep.subr.bf16.mxu0 0
      %470 = vmatpush1.bf16.msra.mxu0 0
      %471 = vmatprep.subr.bf16.mxu0 0
      %472 = vmatpush1.bf16.msra.mxu0 0
      %473 = vmatprep.subr.bf16.mxu0 0
      %474 = vmatpush1.bf16.msra.mxu0 0
      %475 = vmatprep.mubr.bf16.mxu0 0
      %476 = vmatmul.mubr.bf16.gmra.mrb[0].mxu0 %v426
      %v477 = vpop.f32.mrb[0].mxu0
      %v478 = vadd.f32 %v337, %v477
      %v479 = vpop.f32.mrb[0].mxu0
      %v480 = vpop.f32.mrb[0].mxu0
      %v481 = vadd.f32 %v342, %v480
      %v482 = vpop.f32.mrb[0].mxu0
      %483 = vmatprep.mubr.bf16.mxu0 0
      %484 = vmatmul.mubr.bf16.gmra.mrb[0].mxu0 %v429
      %v485 = vpop.f32.mrb[0].mxu0
      %v486 = vadd.f32 %v347, %v485
      %v487 = vpop.f32.mrb[0].mxu0
      %v488 = vpop.f32.mrb[0].mxu0
      %v489 = vadd.f32 %v352, %v488
      %v490 = vpop.f32.mrb[0].mxu0
      %491 = vmatprep.mubr.bf16.mxu0 0
      %492 = vmatmul.mubr.bf16.gmra.mrb[0].mxu0 %v432
      %v493 = vpop.f32.mrb[0].mxu0
      %v494 = vadd.f32 %v357, %v493
      %v495 = vpop.f32.mrb[0].mxu0
      %v496 = vpop.f32.mrb[0].mxu0
      %v497 = vadd.f32 %v362, %v496
      %v498 = vpop.f32.mrb[0].mxu0
      %499 = vmatprep.mubr.bf16.mxu0 0
      %500 = vmatmul.mubr.bf16.gmra.mrb[0].mxu0 %v435
      %v501 = vpop.f32.mrb[0].mxu0
      %v502 = vadd.f32 %v367, %v501
      %v503 = vpop.f32.mrb[0].mxu0
      %v504 = vpop.f32.mrb[0].mxu0
      %v505 = vadd.f32 %v372, %v504
      %v506 = vpop.f32.mrb[0].mxu0
      %507 = vmatprep.mubr.bf16.mxu0 0
      %508 = vmatmul.mubr.bf16.gmra.mrb[0].mxu0 %v438
      %v509 = vpop.f32.mrb[0].mxu0
      %v510 = vadd.f32 %v377, %v509
      %v511 = vpop.f32.mrb[0].mxu0
      %v512 = vpop.f32.mrb[0].mxu0
      %v513 = vadd.f32 %v382, %v512
      %v514 = vpop.f32.mrb[0].mxu0
      %515 = vmatprep.mubr.bf16.mxu0 0
      %516 = vmatmul.mubr.bf16.gmra.mrb[0].mxu0 %v441
      %v517 = vpop.f32.mrb[0].mxu0
      %v518 = vadd.f32 %v387, %v517
      %v519 = vpop.f32.mrb[0].mxu0
      %v520 = vpop.f32.mrb[0].mxu0
      %v521 = vadd.f32 %v392, %v520
      %v522 = vpop.f32.mrb[0].mxu0
      %523 = vdwg.mxu0
      %v524 = vld [vmem:[%s3] sm:$0xff]
      %v525 = vld [vmem:[%s3 + $0x8] sm:$0xff]
      %v526 = vld [vmem:[%s3 + $0x10] sm:$0xff]
      %v527 = vld [vmem:[%s3 + $0x18] sm:$0xff]
      %v528 = vld [vmem:[%s3 + $0x20] sm:$0xff]
      %v529 = vld [vmem:[%s3 + $0x28] sm:$0xff]
      %v530 = vld [vmem:[%s3 + $0x30] sm:$0xff]
      %v531 = vld [vmem:[%s3 + $0x38] sm:$0xff]
      %v532 = vld [vmem:[%s3 + $0x40] sm:$0xff]
      %v533 = vld [vmem:[%s3 + $0x48] sm:$0xff]
      %v534 = vld [vmem:[%s3 + $0x50] sm:$0xff]
      %v535 = vld [vmem:[%s3 + $0x58] sm:$0xff]
      %537 = vset.pattern.permute.xlu0 0
      %538 = vperm.xlu0 %537, %v524
      %v539 = vpop.permute.xlu0 %538
      %542 = vset.pattern.permute.xlu0 0
      %543 = vperm.xlu0 %542, %v525
      %v544 = vpop.permute.xlu0 %543
      %547 = vset.pattern.permute.xlu0 0
      %548 = vperm.xlu0 %547, %v526
      %v549 = vpop.permute.xlu0 %548
      %552 = vset.pattern.permute.xlu0 0
      %553 = vperm.xlu0 %552, %v527
      %v554 = vpop.permute.xlu0 %553
      %557 = vset.pattern.permute.xlu0 0
      %558 = vperm.xlu0 %557, %v528
      %v559 = vpop.permute.xlu0 %558
      %562 = vset.pattern.permute.xlu0 0
      %563 = vperm.xlu0 %562, %v529
      %v564 = vpop.permute.xlu0 %563
      %567 = vset.pattern.permute.xlu0 0
      %568 = vperm.xlu0 %567, %v530
      %v569 = vpop.permute.xlu0 %568
      %572 = vset.pattern.permute.xlu0 0
      %573 = vperm.xlu0 %572, %v531
      %v574 = vpop.permute.xlu0 %573
      %577 = vset.pattern.permute.xlu0 0
      %578 = vperm.xlu0 %577, %v532
      %v579 = vpop.permute.xlu0 %578
      %582 = vset.pattern.permute.xlu0 0
      %583 = vperm.xlu0 %582, %v533
      %v584 = vpop.permute.xlu0 %583
      %587 = vset.pattern.permute.xlu0 0
      %588 = vperm.xlu0 %587, %v534
      %v589 = vpop.permute.xlu0 %588
      %592 = vset.pattern.permute.xlu0 0
      %593 = vperm.xlu0 %592, %v535
      %v594 = vpop.permute.xlu0 %593
      %v596 = vmul.f32 %v478, %v539
      %v597 = vmul.f32 %v481, %v544
      %v598 = vmul.f32 %v486, %v549
      %v599 = vmul.f32 %v489, %v554
      %v600 = vmul.f32 %v494, %v559
      %v601 = vmul.f32 %v497, %v564
      %v602 = vmul.f32 %v502, %v569
      %v603 = vmul.f32 %v505, %v574
      %v604 = vmul.f32 %v510, %v579
      %v605 = vmul.f32 %v513, %v584
      %v606 = vmul.f32 %v518, %v589
      %v607 = vmul.f32 %v521, %v594
      %v608 = vmax.f32 %v478, %v596
      %v609 = vmax.f32 %v481, %v597
      %v610 = vmax.f32 %v486, %v598
      %v611 = vmax.f32 %v489, %v599
      %v612 = vmax.f32 %v494, %v600
      %v613 = vmax.f32 %v497, %v601
      %v614 = vmax.f32 %v502, %v602
      %v615 = vmax.f32 %v505, %v603
      %v616 = vmax.f32 %v510, %v604
      %v617 = vmax.f32 %v513, %v605
      %v618 = vmax.f32 %v518, %v606
      %v619 = vmax.f32 %v521, %v607
      %v620 = vlaneseq
      %v621 = vand.u32 %v620, 127
      %622 = vrot.lane.b32.xlu0 %v608, 8
      %v623 = vpop.permute.xlu0 %622
      %vm624 = vcmp.ge.s32.totalorder %v621, 8
      %v625 = vsel %vm624, %v623, 0.0
      %626 = vrot.lane.b32.xlu0 %v608, 120
      %v627 = vpop.permute.xlu0 %626
      %vm628 = vcmp.lt.s32.totalorder %v621, 120
      %v629 = vsel %vm628, %v627, 0.0
      %630 = vrot.lane.b32.xlu0 %v609, 16
      %v631 = vpop.permute.xlu0 %630
      %vm632 = vcmp.ge.s32.totalorder %v621, 16
      %v633 = vsel %vm632, %v631, 0.0
      %634 = vrot.lane.b32.xlu0 %v609, 112
      %v635 = vpop.permute.xlu0 %634
      %vm636 = vcmp.lt.s32.totalorder %v621, 112
      %v637 = vsel %vm636, %v635, 0.0
      %638 = vrot.lane.b32.xlu0 %v610, 24
      %v639 = vpop.permute.xlu0 %638
      %vm640 = vcmp.ge.s32.totalorder %v621, 24
      %v641 = vsel %vm640, %v639, 0.0
      %642 = vrot.lane.b32.xlu0 %v610, 104
      %v643 = vpop.permute.xlu0 %642
      %vm644 = vcmp.lt.s32.totalorder %v621, 104
      %v645 = vsel %vm644, %v643, 0.0
      %646 = vrot.lane.b32.xlu0 %v611, 32
      %v647 = vpop.permute.xlu0 %646
      %vm648 = vcmp.ge.s32.totalorder %v621, 32
      %v649 = vsel %vm648, %v647, 0.0
      %650 = vrot.lane.b32.xlu0 %v611, 96
      %v651 = vpop.permute.xlu0 %650
      %vm652 = vcmp.lt.s32.totalorder %v621, 96
      %v653 = vsel %vm652, %v651, 0.0
      %v654 = vpack.c.bf16 %v608, %v625
      %v655 = vpack.c.bf16 %v633, %v629
      %v656 = vpack.c.bf16 %v637, %v609
      %v657 = vpack.c.bf16 %v610, %v641
      %v658 = vpack.c.bf16 %v649, %v645
      %v659 = vpack.c.bf16 %v653, %v611
      %v660 = vld [vmem:[%s4] sm:$0xf]
      %v661 = vld [vmem:[%s4 + $0x4] sm:$0xf]
      %v662 = vld [vmem:[%s4 + $0x8] sm:$0xf]
      %v663 = vld [vmem:[%s4 + $0xc] sm:$0xf]
      %v664 = vld [vmem:[%s5] sm:$0xff]
      %v665 = vld [vmem:[%s5 + $0x8] sm:$0xff]
      %v666 = vld [vmem:[%s5 + $0x10] sm:$0xff]
      %v667 = vld [vmem:[%s5 + $0x18] sm:$0xff]
      %669 = vset.pattern.permute.xlu0 0
      %670 = vperm.xlu0 %669, %v664
      %v671 = vpop.permute.xlu0 %670
      %674 = vset.pattern.permute.xlu0 0
      %675 = vperm.xlu0 %674, %v665
      %v676 = vpop.permute.xlu0 %675
      %679 = vset.pattern.permute.xlu0 0
      %680 = vperm.xlu0 %679, %v666
      %v681 = vpop.permute.xlu0 %680
      %684 = vset.pattern.permute.xlu0 0
      %685 = vperm.xlu0 %684, %v667
      %v686 = vpop.permute.xlu0 %685
      %v692 = vunpack.c.l.b16 %v660
      %v693 = vunpack.c.l.b16 %v661
      %v694 = vunpack.c.l.b16 %v662
      %v695 = vunpack.c.l.b16 %v663
      %v696 = vpack.c.b16 %v693, %v692
      %v697 = vpack.c.b16 %v695, %v694
      %vm698 = vcmask 785408
      %v700 = vsel %vm698, %v696, 0
      %v703 = vsel %vm698, %v697, 0
      %705 = vmatprep.subr.bf16.mxu0 0
      %706 = vmatpush1.bf16.msra.mxu0 %v654
      %707 = vmatprep.subr.bf16.mxu0 0
      %708 = vmatpush1.bf16.msra.mxu0 %v655
      %709 = vmatprep.subr.bf16.mxu0 0
      %710 = vmatpush1.bf16.msra.mxu0 %v656
      %711 = vmatprep.subr.bf16.mxu0 0
      %712 = vmatpush1.bf16.msra.mxu0 %v657
      %713 = vmatprep.subr.bf16.mxu0 0
      %714 = vmatpush1.bf16.msra.mxu0 %v658
      %715 = vmatprep.subr.bf16.mxu0 0
      %716 = vmatpush1.bf16.msra.mxu0 %v659
      %717 = vmatprep.subr.bf16.mxu0 0
      %718 = vmatpush1.bf16.msra.mxu0 0
      %719 = vmatprep.subr.bf16.mxu0 0
      %720 = vmatpush1.bf16.msra.mxu0 0
      %721 = vmatprep.subr.bf16.mxu0 0
      %722 = vmatpush1.bf16.msra.mxu0 0
      %723 = vmatprep.subr.bf16.mxu0 0
      %724 = vmatpush1.bf16.msra.mxu0 0
      %725 = vmatprep.subr.bf16.mxu0 0
      %726 = vmatpush1.bf16.msra.mxu0 0
      %727 = vmatprep.subr.bf16.mxu0 0
      %728 = vmatpush1.bf16.msra.mxu0 0
      %729 = vmatprep.subr.bf16.mxu0 0
      %730 = vmatpush1.bf16.msra.mxu0 0
      %731 = vmatprep.subr.bf16.mxu0 0
      %732 = vmatpush1.bf16.msra.mxu0 0
      %733 = vmatprep.subr.bf16.mxu0 0
      %734 = vmatpush1.bf16.msra.mxu0 0
      %735 = vmatprep.subr.bf16.mxu0 0
      %736 = vmatpush1.bf16.msra.mxu0 0
      %737 = vmatprep.mubr.bf16.mxu0 0
      %738 = vmatmul.mubr.bf16.gmra.mrb[0].mxu0 %v700
      %v739 = vpop.f32.mrb[0].mxu0
      %v740 = vadd.f32 %v671, %v739
      %v741 = vpop.f32.mrb[0].mxu0
      %v742 = vpop.f32.mrb[0].mxu0
      %v743 = vadd.f32 %v676, %v742
      %v744 = vpop.f32.mrb[0].mxu0
      %745 = vmatprep.mubr.bf16.mxu0 0
      %746 = vmatmul.mubr.bf16.gmra.mrb[0].mxu0 %v703
      %v747 = vpop.f32.mrb[0].mxu0
      %v748 = vadd.f32 %v681, %v747
      %v749 = vpop.f32.mrb[0].mxu0
      %v750 = vpop.f32.mrb[0].mxu0
      %v751 = vadd.f32 %v686, %v750
      %v752 = vpop.f32.mrb[0].mxu0
      %753 = vdwg.mxu0
      %754 = vrot.lane.b32.xlu0 %v612, 8
      %v755 = vpop.permute.xlu0 %754
      %v756 = vsel %vm624, %v755, 0.0
      %v757 = vadd.f32 %v756, %v612
      %758 = vrot.lane.b32.xlu0 %v612, 120
      %v759 = vpop.permute.xlu0 %758
      %v760 = vsel %vm628, %v759, 0.0
      %v761 = vadd.f32 %v757, %v760
      %v762 = vmul.f32 %v761, 0.33333334
      %v763 = vld [vmem:[%s6] sm:$0xff]
      %765 = vset.pattern.permute.xlu0 0
      %766 = vperm.xlu0 %765, %v763
      %v767 = vpop.permute.xlu0 %766
      %v769 = vmul.f32 %v762, %v767
      %v770 = vld [vmem:[%s7] sm:$0xff]
      %772 = vset.pattern.permute.xlu0 0
      %773 = vperm.xlu0 %772, %v770
      %v774 = vpop.permute.xlu0 %773
      %v776 = vadd.f32 %v769, %v774
      %v777 = vadd.f32 %v740, %v614
      %v778 = vadd.f32 %v743, %v615
      %v779 = vadd.f32 %v748, %v616
      %v780 = vadd.f32 %v751, %v617
      %v781 = vmax.f32 %v777, 0.0
      %v782 = vmax.f32 %v778, 0.0
      %v783 = vmax.f32 %v779, 0.0
      %v784 = vmax.f32 %v780, 0.0
      %785 = vst [vmem:[%s305] sm:$0xff] %v781
      %786 = vst [vmem:[%s305 + $0x8] sm:$0xff] %v782
      %787 = vst [vmem:[%s305 + $0x10] sm:$0xff] %v783
      %788 = vst [vmem:[%s305 + $0x18] sm:$0xff] %v784
      %v789 = vadd.f32 %v776, %v618
      %v790 = vmax.f32 %v789, 0.0
      %791 = vst [vmem:[%s305 + $0x20] sm:$0xff] %v790
      %v792 = vadd.f32 %v613, %v619
      %v793 = vmax.f32 %v792, 0.0
      %794 = vst [vmem:[%s305 + $0x28] sm:$0xff] %v793
      %p795 = scmp.lt.s32.totalorder %s19, 1
      %s796 = scalar_select %p795, %s19, 1
      %s797 = smul.addr %s796, 6
      %s798 = smul.addr %s797, 8
      %s799 = scalar_lea.vmem %s8, %s798
      // Predicated region
      $region53: #{_lambda_.1} parent=51 // pred_check
        %p800 = pneg %p210
      $region54: #{_lambda_.1} parent=51 // pred_check_branch
        %802 = sbr.rel (%p800) target = $region56
      $region55: #{_lambda_.1} parent=51 // pred_region
        _
      $region56: #{_lambda_.1} parent=51 // pred_fallthru
        _
    $region52: #{_lambda_.1} parent=5 // pred_fallthru
      _
    %p803 = scmp.le.s32.totalorder 2, %s14
    // Predicated region
    $region57: #{_lambda_.1} parent=5 // pred_check
      %p804 = pneg %p803
    $region58: #{_lambda_.1} parent=5 // pred_check_branch
      %806 = sbr.rel (%p804) target = $region60
    $region59: #{_lambda_.1} parent=5 // pred_region
      %s807 = ssub.s32 %s14, 2
      // Predicated region
      $region61: #{_lambda_.1} parent=59 // pred_check
        %p808 = pneg %p216
      $region62: #{_lambda_.1} parent=59 // pred_check_branch
        %810 = sbr.rel (%p808) target = $region64
      $region63: #{_lambda_.1} parent=59 // pred_region
        %p811 = scmp.lt.s32.totalorder %s20, 1
        %s812 = scalar_select %p811, %s20, 1
        %s813 = smul.addr %s812, 6
        %s814 = smul.addr %s813, 8
        %s815 = scalar_lea.vmem %s8, %s814
      $region64: #{_lambda_.1} parent=59 // pred_fallthru
        _
    $region60: #{_lambda_.1} parent=5 // pred_fallthru
      _
  $region6: #{_lambda_.1} parent=0 // loop_footer
    %s18 = sadd.s32 1, %s14
  $region7: #{_lambda_.1} parent=0 // loop_footer_branch
    %13 = sbr.rel target = $region3
  $region8: #{_lambda_.1} parent=0 // loop_exit
    _

</llo_original>
